<compile_context>
chip_gen: v7x
topology: tpu7x:2x2x1
jax: 0.10.0
libtpu: 0.0.40
codegen_flags: <defaults>
</compile_context>

<pallas_src>
import jax
import jax.numpy as jnp
from jax.experimental import pallas as pl
from jax.experimental.pallas import tpu as pltpu


_LANE = 128
_MIN_PALLAS_ELEMS = 1024        # levels smaller than this go through plain JAX
_TARGET_TILE_BYTES = 2 << 20    # ~2 MiB output tiles (x2 double buffer)


def _round_up(x, m):
    return ((x + m - 1) // m) * m


# ----------------------------------------------------------------------------
# Parameter setup (equivalent of AnchorGenerator.generate_anchors) -- plain JAX
# ----------------------------------------------------------------------------
def generate_base_anchors(scales, aspect_ratios, dtype=jnp.float32):
    """base_anchors: [A, 4], A = len(aspect_ratios) * len(scales)."""
    scales = jnp.asarray(scales, dtype=dtype)
    aspect_ratios = jnp.asarray(aspect_ratios, dtype=dtype)
    h_ratios = jnp.sqrt(aspect_ratios)
    w_ratios = 1.0 / h_ratios
    ws = (w_ratios[:, None] * scales[None, :]).reshape(-1)
    hs = (h_ratios[:, None] * scales[None, :]).reshape(-1)
    base = jnp.stack([-ws, -hs, ws, hs], axis=1) / 2.0
    return jnp.round(base)  # round-half-to-even, same as torch.round


# ----------------------------------------------------------------------------
# Pure-JAX reference / fallback for one level (also used for tiny levels)
# ----------------------------------------------------------------------------
def _reference_one_level(base_anchors, h, w, sh, sw):
    shifts_x = jnp.arange(0, w, dtype=jnp.int32) * sw
    shifts_y = jnp.arange(0, h, dtype=jnp.int32) * sh
    shift_y, shift_x = jnp.meshgrid(shifts_y, shifts_x, indexing="ij")
    shift_x = shift_x.reshape(-1)
    shift_y = shift_y.reshape(-1)
    shifts = jnp.stack((shift_x, shift_y, shift_x, shift_y), axis=1)
    return (
        shifts.reshape(-1, 1, 4).astype(jnp.float32) + base_anchors.reshape(1, -1, 4)
    ).reshape(-1, 4)


# ----------------------------------------------------------------------------
# Pallas kernel: one H-tile of one feature level, lane-dense (TH, C_pad)
# ----------------------------------------------------------------------------
def _anchor_kernel(tmpl_ref, ymask_ref, ycol_ref, out_ref):
    # tmpl_ref:  (1, C_pad)  base anchors tiled over W, x*stride_w already added
    # ymask_ref: (1, C_pad)  1.0 on y-coordinate columns, 0.0 elsewhere
    # ycol_ref:  (TH, 1)     y * stride_h for the rows of this tile
    # out_ref:   (TH, C_pad)
    out_ref[...] = tmpl_ref[...] + ycol_ref[...] * ymask_ref[...]


def _pick_tile_rows(fmap_h, c_pad, target_bytes=_TARGET_TILE_BYTES):
    """Rows per block: ~2 MiB tiles, multiple of 8, but always >=2 grid blocks
    when fmap_h > 8 so both v7x TensorCores get a share of the writeback."""
    if fmap_h <= 8:
        return fmap_h
    rows = max(8, ((target_bytes // (c_pad * 4)) // 8) * 8)
    half = _round_up(pl.cdiv(fmap_h, 2), 8)   # cap -> at least 2 blocks
    return int(max(8, min(rows, half)))


def grid_anchors_one_level_flat(
    base_anchors, fmap_h, fmap_w, stride_h, stride_w, tile_rows=None
):
    """Anchors for one feature level, flattened to shape [H*W*A*4] float32.

    Flat element order is (y, x, anchor, coord), identical to
    torch.meshgrid('ij') + view(-1, 1, 4) + base + reshape(-1, 4) row-major
    flattening, so a later reshape(-1, 4) reproduces the torch layout exactly.
    """
    A = base_anchors.shape[0]
    C = fmap_w * A * 4
    base = base_anchors.astype(jnp.float32)

    if fmap_h * C < _MIN_PALLAS_ELEMS:
        # tiny upper-pyramid level: kernel-launch overhead would dominate
        return _reference_one_level(base, fmap_h, fmap_w, stride_h, stride_w).reshape(-1)

    C_pad = _round_up(C, _LANE)

    # Row template: element (x, a, k) = base[a, k] + x*stride_w * [k is x-coord]
    x = jnp.arange(fmap_w, dtype=jnp.float32)
    xmask4 = jnp.array([1.0, 0.0, 1.0, 0.0], jnp.float32)   # x1, x2 columns
    ymask4 = jnp.array([0.0, 1.0, 0.0, 1.0], jnp.float32)   # y1, y2 columns
    tmpl = (
        base[None, :, :] + (x[:, None, None] * float(stride_w)) * xmask4[None, None, :]
    ).reshape(1, C)
    ymask = jnp.tile(ymask4, fmap_w * A).reshape(1, C)
    if C_pad != C:
        pad = ((0, 0), (0, C_pad - C))
        tmpl = jnp.pad(tmpl, pad)
        ymask = jnp.pad(ymask, pad)
    # Precomputed y * stride_h column: removes iota/add/convert from the kernel.
    ycol = (jnp.arange(fmap_h, dtype=jnp.float32) * float(stride_h)).reshape(fmap_h, 1)

    TH = _pick_tile_rows(fmap_h, C_pad) if tile_rows is None else tile_rows
    grid = (pl.cdiv(fmap_h, TH),)

    out = pl.pallas_call(
        _anchor_kernel,
        out_shape=jax.ShapeDtypeStruct((fmap_h, C_pad), jnp.float32),
        grid=grid,
        in_specs=[
            pl.BlockSpec((1, C_pad), lambda i: (0, 0)),   # template, resident
            pl.BlockSpec((1, C_pad), lambda i: (0, 0)),   # y mask, resident
            pl.BlockSpec((TH, 1), lambda i: (i, 0)),      # y*stride_h column
        ],
        out_specs=pl.BlockSpec((TH, C_pad), lambda i: (i, 0)),
        compiler_params=pltpu.CompilerParams(dimension_semantics=("parallel",)),
    )(tmpl, ymask, ycol)

    if C_pad != C:
        out = out[:, :C]
    return out.reshape(-1)


# ----------------------------------------------------------------------------
# AnchorGenerator (JAX / Pallas)
# ----------------------------------------------------------------------------
class AnchorGenerator:
    def __init__(self, sizes=((128, 256, 512),), aspect_ratios=((0.5, 1.0, 2.0),)):
        if not isinstance(sizes[0], (list, tuple)):
            sizes = tuple((s,) for s in sizes)
        if not isinstance(aspect_ratios[0], (list, tuple)):
            aspect_ratios = (aspect_ratios,) * len(sizes)
        self.sizes = sizes
        self.aspect_ratios = aspect_ratios
        self.cell_anchors = [
            generate_base_anchors(s, a) for s, a in zip(sizes, aspect_ratios)
        ]
        # Anchors depend only on shapes -> cache per (image_size, fmap sizes, dtype).
        self._cache = {}

    def num_anchors_per_layer(self):
        return [len(s) * len(a) for s, a in zip(self.sizes, self.aspect_ratios)]

    def _build(self, image_size, feature_map_sizes):
        strides = [
            (image_size[0] // h, image_size[1] // w) for (h, w) in feature_map_sizes
        ]
        flats = []
        for (h, w), (sh, sw), base in zip(
            feature_map_sizes, strides, self.cell_anchors
        ):
            flats.append(grid_anchors_one_level_flat(base, h, w, sh, sw))
        # Single flat concat + one final relayout to the torch (N, 4) contract.
        # TODO(synk): a consumer that accepts the lane-dense (H, W*A*4) per-level
        # form would avoid this last relayout entirely.
        return jnp.concatenate(flats, axis=0).reshape(-1, 4)

    def __call__(self, image_tensors, feature_maps):
        """
        image_tensors: [B, C, H_img, W_img]  (the ImageList.tensors)
        feature_maps: list of [B, C_i, H_i, W_i]
        Returns: list (length B) of [sum_i H_i*W_i*A_i, 4] anchor tensors.
        """
        feature_map_sizes = tuple(
            tuple(int(d) for d in fm.shape[-2:]) for fm in feature_maps
        )
        image_size = tuple(int(d) for d in image_tensors.shape[-2:])
        out_dtype = feature_maps[0].dtype  # torchvision emits the feature dtype
        key = (image_size, feature_map_sizes, str(out_dtype))
        if key not in self._cache:
            self._cache[key] = self._build(image_size, feature_map_sizes).astype(
                out_dtype
            )
        anchors = self._cache[key]
        batch = image_tensors.shape[0]
        return [anchors for _ in range(batch)]


# ----------------------------------------------------------------------------
# Self-test
# ----------------------------------------------------------------------------
if __name__ == "__main__":
    key = jax.random.PRNGKey(0)
    k1, k2, k3 = jax.random.split(key, 3)

    batch, chans = 2, 4
    img_h, img_w = 64, 64
    image_tensors = jax.random.normal(k1, (batch, 3, img_h, img_w), jnp.float32)
    # two feature levels: 16x16 (C=384, 2 grid blocks) and 8x8 (C=192 -> padded to 256)
    fmap0 = jax.random.normal(k2, (batch, chans, 16, 16), jnp.float32)
    fmap1 = jax.random.normal(k3, (batch, chans, 8, 8), jnp.float32)
    feature_maps = [fmap0, fmap1]

    gen = AnchorGenerator(
        sizes=((32, 64), (128, 256)),
        aspect_ratios=((0.5, 1.0, 2.0), (0.5, 1.0, 2.0)),
    )

    anchors = gen(image_tensors, feature_maps)
    anchors = [jax.block_until_ready(a) for a in anchors]

    # reference (pure JAX)
    ref_levels = []
    for (h, w), base in zip([(16, 16), (8, 8)], gen.cell_anchors):
        sh, sw = img_h // h, img_w // w
        ref_levels.append(_reference_one_level(base, h, w, sh, sw))
    ref = jnp.concatenate(ref_levels, axis=0)

    expected_rows = sum(
        h * w * n
        for (h, w), n in zip([(16, 16), (8, 8)], gen.num_anchors_per_layer())
    )
    assert len(anchors) == batch
    for a in anchors:
        assert a.shape == (expected_rows, 4), a.shape
        assert a.dtype == jnp.float32
        assert bool(jnp.array_equal(a, ref)), "mismatch vs reference"

    # cache hit: second call must reuse the exact same buffer
    anchors2 = gen(image_tensors, feature_maps)
    assert anchors2[0] is anchors[0], "cache miss on identical shapes"

    # multi-block grid with a partial last block + non-128-multiple C (12*6*4=288 -> 384)
    h2, w2 = 20, 12
    a_tiled = jax.block_until_ready(
        grid_anchors_one_level_flat(gen.cell_anchors[0], h2, w2, 4, 4, tile_rows=8)
    )
    ref2 = _reference_one_level(gen.cell_anchors[0], h2, w2, 4, 4).reshape(-1)
    assert bool(jnp.array_equal(a_tiled, ref2)), "tiled/padded mismatch"

    # tiny-level plain-JAX fallback path
    a_tiny = jax.block_until_ready(
        grid_anchors_one_level_flat(gen.cell_anchors[1], 2, 2, 32, 32)
    )
    ref3 = _reference_one_level(gen.cell_anchors[1], 2, 2, 32, 32).reshape(-1)
    assert bool(jnp.array_equal(a_tiny, ref3)), "tiny-level fallback mismatch"

    print("KERNEL_OK")
</pallas_src>

<mosaic_0001>
module attributes {stable_mosaic.version = 11 : i64} {
  func.func @_anchor_kernel(%arg0: i32, %arg1: memref<1x384xf32, #tpu.memory_space<vmem>>, %arg2: memref<1x384xf32, #tpu.memory_space<vmem>>, %arg3: memref<8x1xf32, #tpu.memory_space<vmem>>, %arg4: memref<8x384xf32, #tpu.memory_space<vmem>>) attributes {dimension_semantics = [#tpu.dimension_semantics<parallel>], iteration_bounds = array<i64: 2>, scalar_prefetch = 0 : i64, scratch_operands = 0 : i64, tpu.core_type = #tpu.core_type<tc>, window_params = [{pipeline_mode = #tpu.pipeline_mode<synchronous>, transform_indices = @transform_0, window_bounds = array<i64: 1, 384>}, {pipeline_mode = #tpu.pipeline_mode<synchronous>, transform_indices = @transform_1, window_bounds = array<i64: 1, 384>}, {transform_indices = @transform_2, window_bounds = array<i64: 8, 1>}, {transform_indices = @transform_3, window_bounds = array<i64: 8, 384>}]} {
    %c0 = arith.constant 0 : index
    %c0_0 = arith.constant 0 : index
    %0 = vector.load %arg1[%c0, %c0_0] : memref<1x384xf32, #tpu.memory_space<vmem>>, vector<1x384xf32>
    %c0_1 = arith.constant 0 : index
    %c0_2 = arith.constant 0 : index
    %1 = vector.load %arg3[%c0_1, %c0_2] : memref<8x1xf32, #tpu.memory_space<vmem>>, vector<8x1xf32>
    %c0_3 = arith.constant 0 : index
    %c0_4 = arith.constant 0 : index
    %2 = vector.load %arg2[%c0_3, %c0_4] : memref<1x384xf32, #tpu.memory_space<vmem>>, vector<1x384xf32>
    %3 = vector.broadcast %1 : vector<8x1xf32> to vector<8x384xf32>
    %4 = vector.broadcast %2 : vector<1x384xf32> to vector<8x384xf32>
    %5 = arith.mulf %3, %4 : vector<8x384xf32>
    %6 = vector.broadcast %0 : vector<1x384xf32> to vector<8x384xf32>
    %7 = arith.addf %6, %5 : vector<8x384xf32>
    %c0_5 = arith.constant 0 : index
    %c0_6 = arith.constant 0 : index
    %8 = vector.load %arg4[%c0_5, %c0_6] : memref<8x384xf32, #tpu.memory_space<vmem>>, vector<8x384xf32>
    tpu.vector_store %arg4[%c0_5, %c0_6], %7 {strides = array<i32>} : memref<8x384xf32, #tpu.memory_space<vmem>>, vector<8x384xf32>,
    return
  }
  func.func @transform_0(%arg0: i32) -> (i32, i32) {
    %c0_i32 = arith.constant 0 : i32
    %c0_i32_0 = arith.constant 0 : i32
    %c0_i32_1 = arith.constant 0 : i32
    return %c0_i32, %c0_i32_0 : i32, i32
  }
  func.func @transform_1(%arg0: i32) -> (i32, i32) {
    %c0_i32 = arith.constant 0 : i32
    %c0_i32_0 = arith.constant 0 : i32
    %c0_i32_1 = arith.constant 0 : i32
    return %c0_i32, %c0_i32_0 : i32, i32
  }
  func.func @transform_2(%arg0: i32) -> (i32, i32) {
    %c0_i32 = arith.constant 0 : i32
    %c0_i32_0 = arith.constant 0 : i32
    return %arg0, %c0_i32 : i32, i32
  }
  func.func @transform_3(%arg0: i32) -> (i32, i32) {
    %c0_i32 = arith.constant 0 : i32
    %c0_i32_0 = arith.constant 0 : i32
    return %arg0, %c0_i32 : i32, i32
  }
}

</mosaic_0001>

<llo_original>
// kernel: tpu_custom_call.1
$region0: #{tpu_custom_call.1}
  #allocation0 [shape = 'u32[]', space=smem, size = 0x4, offset = 0x4, fixed_abs, tag = 'smem constant byte address 0x4 - core index']
  #allocation1 [shape = 'u32[144,128]{1,0:T(1,128)}', space=vmem, size = 0x12000, scoped, tag = 'internal scratch']
  %s0 = inlined_call_operand.vmem [shape: f32[1,384], index: 0, kind: input, shape index: {}]
  %s1 = inlined_call_operand.vmem [shape: f32[1,384], index: 1, kind: input, shape index: {}]
  %s2 = inlined_call_operand.vmem [shape: f32[16,1], index: 2, kind: input, shape index: {}]
  %s3 = inlined_call_operand.hbm [shape: f32[16,384], index: 3, kind: output, shape index: {}]
  %s4 = sld [smem:[#allocation0]]
  $region45: #{tpu_custom_call.1} parent=0
    _
  %s6 = ssub.s32 1, %s4
  %s7 = scalar_select 0, %s6, %s4
  $region1: #{tpu_custom_call.1} parent=0
    #allocation2 [shape = 'u8[24576]{0}', space=vmem, size = 0x6000, scoped, tag = 'output window, operand 0']
    #allocation3 [shape = 's32[2]{0}', space=sflag, size = 0x8, scoped, tag = 'scoped memory for tpu_custom_call.1']
    %8 = vsyncpa [#allocation3], 0
    %s9 = scalar_lea.sflag [#allocation3], 1
    %10 = vsyncpa %s9, 0
    loop: start=0, step=1, limit=4
    $region2: #{tpu_custom_call.1} parent=1 // loop_pre_header
      _
    $region3: #{tpu_custom_call.1} parent=1 // loop_header
      %s12 = sphi 0, %s16
      %p13 = scmp.ge.s32.totalorder %s12, 4
      %s20 = sphi 0, %s20
      %s22 = sphi 0, %s20
      %s23 = sphi 0, %s22
      %s37 = sphi 0, %s23
      %s41 = sphi 0, %s41
      %s43 = sphi 0, %s41
      %s44 = sphi 0, %s43
      %s58 = sphi 0, %s44
      %s64 = sphi 0, %s66
      %s67 = sphi 0, %s64
      %s68 = sphi 0, %s67
      %s84 = sphi 0, %s68
      %s90 = sphi 0, %s92
      %s93 = sphi 0, %s90
      %s94 = sphi 0, %s93
      %s110 = sphi 0, %s94
    $region4: #{tpu_custom_call.1} parent=1 // loop_header_branch
      %15 = sbr.rel (%p13) target = $region8
    $region5: #{tpu_custom_call.1} parent=1 // loop_body
      %s17 = ssub.s32 %s12, 1
      %s18 = ssub.s32 %s12, 2
      %s19 = sadd.s32 %s12, 1
      %s21 = sadd.s32 %s20, 1
      %p24 = scmp.eq.s32.totalorder %s12, 1
      %p25 = scmp.ne.s32.totalorder %s20, %s22
      %p26 = scmp.eq.s32.totalorder %s12, 0
      %p27 = por %p25, %p26
      %p28 = scmp.ne.s32.totalorder %s20, %s22
      %p29 = scmp.eq.s32.totalorder %s17, 1
      %p30 = por %p28, %p29
      %p31 = scmp.ne.s32.totalorder %s22, %s23
      %p32 = scmp.eq.s32.totalorder %s17, 0
      %p33 = por %p31, %p32
      %p34 = scmp.ne.s32.totalorder %s22, %s23
      %p35 = scmp.eq.s32.totalorder %s18, 1
      %p36 = por %p34, %p35
      %p38 = scmp.ne.s32.totalorder %s23, %s37
      %p39 = scmp.eq.s32.totalorder %s18, 0
      %p40 = por %p38, %p39
      %s42 = sadd.s32 %s41, 1
      %p45 = scmp.eq.s32.totalorder %s12, 1
      %p46 = scmp.ne.s32.totalorder %s41, %s43
      %p47 = scmp.eq.s32.totalorder %s12, 0
      %p48 = por %p46, %p47
      %p49 = scmp.ne.s32.totalorder %s41, %s43
      %p50 = scmp.eq.s32.totalorder %s17, 1
      %p51 = por %p49, %p50
      %p52 = scmp.ne.s32.totalorder %s43, %s44
      %p53 = scmp.eq.s32.totalorder %s17, 0
      %p54 = por %p52, %p53
      %p55 = scmp.ne.s32.totalorder %s43, %s44
      %p56 = scmp.eq.s32.totalorder %s18, 1
      %p57 = por %p55, %p56
      %p59 = scmp.ne.s32.totalorder %s44, %s58
      %p60 = scmp.eq.s32.totalorder %s18, 0
      %p61 = por %p59, %p60
      %s62 = ssub.s32 %s12, %s19
      %p63 = scmp.eq.s32.totalorder %s62, 0
      %s65 = sadd.s32 %s64, 1
      %s66 = scalar_select %p63, %s64, %s65
      %p69 = pneg %p63
      %p70 = scmp.eq.s32.totalorder %s12, 1
      %p71 = por %p69, %p70
      %p72 = scmp.ne.s32.totalorder %s64, %s67
      %p73 = scmp.eq.s32.totalorder %s12, 0
      %p74 = por %p72, %p73
      %p75 = scmp.ne.s32.totalorder %s64, %s67
      %p76 = scmp.eq.s32.totalorder %s17, 1
      %p77 = por %p75, %p76
      %p78 = scmp.ne.s32.totalorder %s67, %s68
      %p79 = scmp.eq.s32.totalorder %s17, 0
      %p80 = por %p78, %p79
      %p81 = scmp.ne.s32.totalorder %s67, %s68
      %p82 = scmp.eq.s32.totalorder %s18, 1
      %p83 = por %p81, %p82
      %p85 = scmp.ne.s32.totalorder %s68, %s84
      %p86 = scmp.eq.s32.totalorder %s18, 0
      %p87 = por %p85, %p86
      %s88 = ssub.s32 %s12, %s19
      %p89 = scmp.eq.s32.totalorder %s88, 0
      %s91 = sadd.s32 %s90, 1
      %s92 = scalar_select %p89, %s90, %s91
      %p95 = pneg %p89
      %p96 = scmp.eq.s32.totalorder %s12, 1
      %p97 = por %p95, %p96
      %p98 = scmp.ne.s32.totalorder %s90, %s93
      %p99 = scmp.eq.s32.totalorder %s12, 0
      %p100 = por %p98, %p99
      %p101 = scmp.ne.s32.totalorder %s90, %s93
      %p102 = scmp.eq.s32.totalorder %s17, 1
      %p103 = por %p101, %p102
      %p104 = scmp.ne.s32.totalorder %s93, %s94
      %p105 = scmp.eq.s32.totalorder %s17, 0
      %p106 = por %p104, %p105
      %p107 = scmp.ne.s32.totalorder %s93, %s94
      %p108 = scmp.eq.s32.totalorder %s18, 1
      %p109 = por %p107, %p108
      %p111 = scmp.ne.s32.totalorder %s94, %s110
      %p112 = scmp.eq.s32.totalorder %s18, 0
      %p113 = por %p111, %p112
      %p114 = scmp.le.s32.totalorder 1, %s12
      %p115 = scmp.lt.s32.totalorder %s12, 3
      %p116 = pnand %p114, %p115
      %p117 = pneg %p116
      // Predicated region
      $region9: #{tpu_custom_call.1} parent=5 // pred_check
        _
      $region10: #{tpu_custom_call.1} parent=5 // pred_check_branch
        %119 = sbr.rel (%p116) target = $region12
      $region11: #{tpu_custom_call.1} parent=5 // pred_region
        %s120 = ssub.s32 %s12, 1
        // Predicated region
        $region13: #{tpu_custom_call.1} parent=11 // pred_check
          %p121 = pneg %p33
        $region14: #{tpu_custom_call.1} parent=11 // pred_check_branch
          %123 = sbr.rel (%p121) target = $region16
        $region15: #{tpu_custom_call.1} parent=11 // pred_region
          _
        $region16: #{tpu_custom_call.1} parent=11 // pred_fallthru
          _
        // Predicated region
        $region17: #{tpu_custom_call.1} parent=11 // pred_check
          %p124 = pneg %p54
        $region18: #{tpu_custom_call.1} parent=11 // pred_check_branch
          %126 = sbr.rel (%p124) target = $region20
        $region19: #{tpu_custom_call.1} parent=11 // pred_region
          _
        $region20: #{tpu_custom_call.1} parent=11 // pred_fallthru
          _
      $region12: #{tpu_custom_call.1} parent=5 // pred_fallthru
        _
      %p127 = scmp.lt.s32.totalorder %s12, 2
      // Predicated region
      $region21: #{tpu_custom_call.1} parent=5 // pred_check
        %p128 = pneg %p127
      $region22: #{tpu_custom_call.1} parent=5 // pred_check_branch
        %130 = sbr.rel (%p128) target = $region24
      $region23: #{tpu_custom_call.1} parent=5 // pred_region
        // Predicated region
        $region25: #{tpu_custom_call.1} parent=23 // pred_check
          %p131 = pneg %p74
        $region26: #{tpu_custom_call.1} parent=23 // pred_check_branch
          %133 = sbr.rel (%p131) target = $region28
        $region27: #{tpu_custom_call.1} parent=23 // pred_region
          %p134 = scmp.lt.s32.totalorder %s12, 1
          %s135 = scalar_select %p134, %s12, 1
          %s136 = smul.addr %s135, 8
          %s137 = scalar_lea.vmem %s2, %s136
        $region28: #{tpu_custom_call.1} parent=23 // pred_fallthru
          _
      $region24: #{tpu_custom_call.1} parent=5 // pred_fallthru
        _
      %p138 = scmp.le.s32.totalorder 1, %s12
      %p139 = scmp.lt.s32.totalorder %s12, 3
      %p140 = pnand %p138, %p139
      %p141 = pneg %p140
      // Predicated region
      $region29: #{tpu_custom_call.1} parent=5 // pred_check
        _
      $region30: #{tpu_custom_call.1} parent=5 // pred_check_branch
        %143 = sbr.rel (%p140) target = $region32
      $region31: #{tpu_custom_call.1} parent=5 // pred_region
        %s144 = ssub.s32 %s12, 1
        %p145 = pneg %p33
        %p146 = pneg %p30
        %p147 = pneg %p54
        %p148 = pneg %p51
        %p149 = scmp.lt.s32.totalorder %s17, 1
        %s150 = scalar_select %p149, %s17, 1
        %s151 = smul.addr %s150, 8
        %s152 = scalar_lea.vmem %s2, %s151
        %p153 = pneg %p80
        %p154 = pneg %p77
        %p155 = pneg %p106
        %p156 = pneg %p103
        %s157 = sand.u32 %s93, 1
        %s158 = scalar_lea.sflag [#allocation3], %s157
        %s159 = sand.u32 %s93, 1
        %s160 = smul.addr %s159, 24
        %s161 = scalar_lea.vmem [#allocation2], %s160
        %p162 = scmp.lt.s32.totalorder %s17, 1
        %s163 = scalar_select %p162, %s17, 1
        %s164 = smul.addr %s163, 8
        %s165 = scalar_lea.vmem %s2, %s164
        %v166 = vld [vmem:[%s0] sm:$0x7]
        %v167 = vld [vmem:[%s165] sm:$0xff]
        %v168 = vld [vmem:[%s1] sm:$0x7]
        %170 = vset.pattern.permute.xlu0 0
        %171 = vperm.xlu0 %170, %v167
        %v172 = vpop.permute.xlu0 %171
        %v175 = vlaneseq
        %v176 = vshrl.u32 %v175, 7
        %v177 = vsub.s32 0, %v176
        %v178 = vrot.slane %v168, %v177
        %v179 = vlaneseq
        %v180 = vshrl.u32 %v179, 7
        %v181 = vsub.s32 1, %v180
        %v182 = vrot.slane %v168, %v181
        %v183 = vlaneseq
        %v184 = vshrl.u32 %v183, 7
        %v185 = vsub.s32 2, %v184
        %v186 = vrot.slane %v168, %v185
        %v190 = vmul.f32 %v172, %v178
        %v191 = vmul.f32 %v172, %v182
        %v192 = vmul.f32 %v172, %v186
        %v194 = vlaneseq
        %v195 = vshrl.u32 %v194, 7
        %v196 = vsub.s32 0, %v195
        %v197 = vrot.slane %v166, %v196
        %v198 = vlaneseq
        %v199 = vshrl.u32 %v198, 7
        %v200 = vsub.s32 1, %v199
        %v201 = vrot.slane %v166, %v200
        %v202 = vlaneseq
        %v203 = vshrl.u32 %v202, 7
        %v204 = vsub.s32 2, %v203
        %v205 = vrot.slane %v166, %v204
        %v209 = vadd.f32 %v197, %v190
        %v210 = vadd.f32 %v201, %v191
        %v211 = vadd.f32 %v205, %v192
        %212 = vst [vmem:[%s161] sm:$0xff] %v209
        %213 = vst [vmem:[%s161 + $0x8] sm:$0xff] %v210
        %214 = vst [vmem:[%s161 + $0x10] sm:$0xff] %v211
        %s215 = sand.u32 %s93, 1
        %s216 = scalar_lea.sflag [#allocation3], %s215
        %s217 = sand.u32 %s93, 1
        %s218 = smul.addr %s217, 24
        %s219 = scalar_lea.vmem [#allocation2], %s218
        // Predicated region
        $region33: #{tpu_custom_call.1} parent=31 // pred_check
          %p220 = pneg %p103
        $region34: #{tpu_custom_call.1} parent=31 // pred_check_branch
          %222 = sbr.rel (%p220) target = $region36
        $region35: #{tpu_custom_call.1} parent=31 // pred_region
          %s224 = ssub.s32 384, 384
          %225 = vsyncadd %s216, %s224
          %s226 = smul.addr %s17, 3
          %s227 = smul.addr %s226, 128
          %s228 = scalar_lea.hbm %s3, %s227
          %s230 = sshll.u32 %s219, 4
          %s231 = int_to_ptr.vmem [resolvable:$true] %s230
          %233 = dma.vmem_to_hbm [thread:$0]  %s231, 384, %s228, %s216
        $region36: #{tpu_custom_call.1} parent=31 // pred_fallthru
          _
      $region32: #{tpu_custom_call.1} parent=5 // pred_fallthru
        _
      %p234 = scmp.le.s32.totalorder 2, %s12
      // Predicated region
      $region37: #{tpu_custom_call.1} parent=5 // pred_check
        %p235 = pneg %p234
      $region38: #{tpu_custom_call.1} parent=5 // pred_check_branch
        %237 = sbr.rel (%p235) target = $region40
      $region39: #{tpu_custom_call.1} parent=5 // pred_region
        %s238 = ssub.s32 %s12, 2
        // Predicated region
        $region41: #{tpu_custom_call.1} parent=39 // pred_check
          %p239 = pneg %p109
        $region42: #{tpu_custom_call.1} parent=39 // pred_check_branch
          %241 = sbr.rel (%p239) target = $region44
        $region43: #{tpu_custom_call.1} parent=39 // pred_region
          %s242 = sand.u32 %s94, 1
          %s243 = scalar_lea.sflag [#allocation3], %s242
          %s244 = sand.u32 %s94, 1
          %s245 = smul.addr %s244, 24
          %s246 = scalar_lea.vmem [#allocation2], %s245
          %247 = dma.done %s243, 384
        $region44: #{tpu_custom_call.1} parent=39 // pred_fallthru
          _
      $region40: #{tpu_custom_call.1} parent=5 // pred_fallthru
        _
    $region6: #{tpu_custom_call.1} parent=1 // loop_footer
      %s16 = sadd.s32 1, %s12
    $region7: #{tpu_custom_call.1} parent=1 // loop_footer_branch
      %11 = sbr.rel target = $region3
    $region8: #{tpu_custom_call.1} parent=1 // loop_exit
      _
    %248 = vsyncpa [#allocation3], 1
    %s249 = scalar_lea.sflag [#allocation3], 1
    %250 = vsyncpa %s249, 1

</llo_original>
